<compile_context>
chip_gen: v5e
topology: v5e:2x2
jax: 0.10.0
libtpu: 0.0.40
codegen_flags: <defaults>
</compile_context>

<pallas_src>
import functools

import jax
import jax.numpy as jnp
from jax.experimental import pallas as pl
from jax.experimental.pallas import tpu as pltpu

ADL_DROP_RATE = 0.75
ADL_DROP_THRESHOLD = 0.8


def _adl_kernel(binary_ref, x_ref, o_ref, *, inv_c, thr):
    # binary_ref: SMEM scalar-prefetch ref, shape (1,), float32 (0.0 or 1.0)
    # x_ref / o_ref: VMEM blocks of shape (TB, C, HW) (logical, un-padded)
    x = x_ref[...]                                            # (TB, C, HW)

    # channel mean, accumulated in f32 (sublane reduction)
    attention = jnp.sum(x, axis=1, keepdims=True, dtype=jnp.float32) * inv_c

    # importance map (EUP) and drop mask (XLU lane reduce) — both computed;
    # they live on units with large slack in this HBM-bound kernel.
    importance = jax.nn.sigmoid(attention)                    # (TB, 1, HW)
    mx = jnp.max(attention, axis=-1, keepdims=True)           # (TB, 1, 1)
    drop_mask = (attention < mx * thr).astype(jnp.float32)    # (TB, 1, HW)

    binary = binary_ref[0]                                    # 0.0 or 1.0
    sel = (1.0 - binary) * importance + binary * drop_mask    # (TB, 1, HW) f32

    if x.dtype == jnp.float32:
        out = x * sel
    else:
        # keep the dominant C*HW multiply in the input dtype (bf16 on v6e/v7x)
        out = x * sel.astype(x.dtype)
    o_ref[...] = out.astype(o_ref.dtype)


def _round_up(v, m):
    return (v + m - 1) // m * m


def _num_tensorcores():
    """Best-effort count of TensorCores per device (1 if unknown)."""
    try:
        return max(1, int(getattr(jax.devices()[0], "num_cores", 1)))
    except Exception:  # pragma: no cover
        return 1


def _padded_block_bytes(tb, c, hw, itemsize):
    """VMEM bytes of one (tb, c, hw) block after Mosaic tile padding."""
    sub_mult = 8 * max(1, 4 // itemsize)          # f32: 8, bf16: 16, int8: 32
    return tb * _round_up(c, sub_mult) * _round_up(hw, 128) * itemsize


def _choose_tb(batch, bytes_per_batch, target_bytes=4 << 20, min_grid=1):
    """Largest divisor of `batch` whose padded block fits `target_bytes`,
    honoring a minimum grid length (only enforced on multi-core parts)."""
    min_grid = min(min_grid, batch)
    best = 1
    for tb in range(1, batch + 1):
        if batch % tb:
            continue
        if tb * bytes_per_batch > target_bytes:
            continue
        if batch // tb < min_grid:
            continue
        best = tb
    return best


def adl_forward(x, key, training=True,
                drop_rate=ADL_DROP_RATE, drop_threshold=ADL_DROP_THRESHOLD):
    """x: (B, C, H, W) NCHW. Returns same shape/dtype."""
    if not training:
        return x

    B, C, H, W = x.shape
    HW = H * W
    itemsize = jnp.dtype(x.dtype).itemsize

    # lane-dense view; no explicit padding (reshape is metadata-only)
    x2 = x.reshape(B, C, HW)

    # binary = floor(rand() + drop_rate)  -> 1.0 with prob drop_rate
    random_scalar = jax.random.uniform(key, (), dtype=jnp.float32)
    binary = jnp.floor(random_scalar + jnp.float32(drop_rate))
    binary = jnp.reshape(binary, (1,)).astype(jnp.float32)

    bytes_per_b = _padded_block_bytes(1, C, HW, itemsize)
    min_grid = 2 if _num_tensorcores() >= 2 else 1
    TB = _choose_tb(B, bytes_per_b, target_bytes=4 << 20, min_grid=min_grid)
    grid = (B // TB,)

    # VMEM budget: double-buffered input + output blocks + headroom.
    block_bytes = _padded_block_bytes(TB, C, HW, itemsize)
    vmem_limit = int(min(max(4 * block_bytes + (2 << 20), 16 << 20), 100 << 20))

    kernel = functools.partial(_adl_kernel, inv_c=1.0 / C,
                               thr=float(drop_threshold))

    grid_spec = pltpu.PrefetchScalarGridSpec(
        num_scalar_prefetch=1,
        grid=grid,
        in_specs=[
            pl.BlockSpec((TB, C, HW), lambda b, binref: (b, 0, 0)),
        ],
        out_specs=pl.BlockSpec((TB, C, HW), lambda b, binref: (b, 0, 0)),
    )

    out2 = pl.pallas_call(
        kernel,
        out_shape=jax.ShapeDtypeStruct((B, C, HW), x.dtype),
        grid_spec=grid_spec,
        compiler_params=pltpu.CompilerParams(
            dimension_semantics=("parallel",),
            vmem_limit_bytes=vmem_limit),
    )(binary, x2)

    return out2.reshape(B, C, H, W)


def adl_reference(x, binary, drop_threshold=ADL_DROP_THRESHOLD):
    """Pure-JAX reference for correctness checking (matches PyTorch ADL)."""
    xf = x.astype(jnp.float32)
    attention = jnp.mean(xf, axis=1, keepdims=True)
    importance_map = jax.nn.sigmoid(attention)
    max_val = jnp.max(attention, axis=(2, 3), keepdims=True)
    drop_mask = (attention < max_val * drop_threshold).astype(jnp.float32)
    selected_map = (1.0 - binary) * importance_map + binary * drop_mask
    return (xf * selected_map).astype(x.dtype)


if __name__ == "__main__":
    key = jax.random.PRNGKey(0)
    kx, kr, kx2, kr2, kx3, kr3 = jax.random.split(key, 6)

    # shape implied by the module's typical use
    B, C, H, W = 2, 4, 16, 16
    x = jax.random.normal(kx, (B, C, H, W), dtype=jnp.float32)

    out = jax.block_until_ready(adl_forward(x, kr, training=True))

    # verify against pure-JAX reference using the same random draw
    random_scalar = jax.random.uniform(kr, (), dtype=jnp.float32)
    binary = jnp.floor(random_scalar + jnp.float32(ADL_DROP_RATE))
    ref = adl_reference(x, binary)
    assert out.shape == x.shape and out.dtype == x.dtype
    assert jnp.allclose(out, ref, atol=1e-5, rtol=1e-5)

    # a shape that exercises the ragged spatial dim (H*W % 128 != 0)
    B2, C2, H2, W2 = 4, 3, 7, 9
    x2 = jax.random.normal(kx2, (B2, C2, H2, W2), dtype=jnp.float32)
    out2 = jax.block_until_ready(adl_forward(x2, kr2, training=True))
    random_scalar2 = jax.random.uniform(kr2, (), dtype=jnp.float32)
    binary2 = jnp.floor(random_scalar2 + jnp.float32(ADL_DROP_RATE))
    ref2 = adl_reference(x2, binary2)
    assert out2.shape == x2.shape and out2.dtype == x2.dtype
    assert jnp.allclose(out2, ref2, atol=1e-5, rtol=1e-5)

    # bf16 path (multiply stays in bf16 inside the kernel -> loose tolerance)
    B3, C3, H3, W3 = 2, 8, 7, 7
    x3 = jax.random.normal(kx3, (B3, C3, H3, W3), dtype=jnp.bfloat16)
    out3 = jax.block_until_ready(adl_forward(x3, kr3, training=True))
    random_scalar3 = jax.random.uniform(kr3, (), dtype=jnp.float32)
    binary3 = jnp.floor(random_scalar3 + jnp.float32(ADL_DROP_RATE))
    ref3 = adl_reference(x3, binary3)
    assert out3.shape == x3.shape and out3.dtype == x3.dtype
    assert jnp.allclose(out3.astype(jnp.float32), ref3.astype(jnp.float32),
                        atol=5e-2, rtol=5e-2)

    # eval mode is identity
    out_eval = adl_forward(x, kr, training=False)
    assert jnp.array_equal(out_eval, x)

    print("KERNEL_OK")
</pallas_src>

<mosaic_0001>
module attributes {stable_mosaic.version = 11 : i64} {
  func.func @_adl_kernel(%arg0: i32, %arg1: memref<1xf32, #tpu.memory_space<smem>>, %arg2: memref<2x4x256xf32, #tpu.memory_space<vmem>>, %arg3: memref<2x4x256xf32, #tpu.memory_space<vmem>>) attributes {dimension_semantics = [#tpu.dimension_semantics<parallel>], iteration_bounds = array<i64: 1>, scalar_prefetch = 1 : i64, scratch_operands = 0 : i64, tpu.core_type = #tpu.core_type<tc>, window_params = [{transform_indices = @transform_0, window_bounds = array<i64: 2, 4, 256>}, {transform_indices = @transform_1, window_bounds = array<i64: 2, 4, 256>}]} {
    %c0 = arith.constant 0 : index
    %c0_0 = arith.constant 0 : index
    %c0_1 = arith.constant 0 : index
    %0 = vector.load %arg2[%c0, %c0_0, %c0_1] : memref<2x4x256xf32, #tpu.memory_space<vmem>>, vector<2x4x256xf32>
    %cst = arith.constant dense<0.000000e+00> : vector<2x256xf32>
    %1 = vector.multi_reduction <add>, %0, %cst [1] : vector<2x4x256xf32> to vector<2x256xf32>
    %2 = vector.shape_cast %1 : vector<2x256xf32> to vector<2x1x256xf32>
    %cst_2 = arith.constant 2.500000e-01 : f32
    %3 = vector.broadcast %cst_2 : f32 to vector<2x1x256xf32>
    %4 = arith.mulf %2, %3 : vector<2x1x256xf32>
    %5 = arith.negf %4 : vector<2x1x256xf32>
    %6 = math.exp %5 : vector<2x1x256xf32>
    %cst_3 = arith.constant 1.000000e+00 : f32
    %7 = vector.broadcast %cst_3 : f32 to vector<2x1x256xf32>
    %8 = arith.addf %7, %6 : vector<2x1x256xf32>
    %9 = arith.divf %7, %8 : vector<2x1x256xf32>
    %cst_4 = arith.constant dense<0xFF800000> : vector<2x1xf32>
    %10 = vector.multi_reduction <maximumf>, %4, %cst_4 [2] : vector<2x1x256xf32> to vector<2x1xf32>
    %11 = vector.shape_cast %10 : vector<2x1xf32> to vector<2x1x1xf32>
    %cst_5 = arith.constant 8.000000e-01 : f32
    %12 = vector.broadcast %cst_5 : f32 to vector<2x1x1xf32>
    %13 = arith.mulf %11, %12 : vector<2x1x1xf32>
    %14 = vector.broadcast %13 : vector<2x1x1xf32> to vector<2x1x256xf32>
    %15 = arith.cmpf olt, %4, %14 : vector<2x1x256xf32>
    %16 = arith.extui %15 : vector<2x1x256xi1> to vector<2x1x256xi32>
    %17 = arith.sitofp %16 : vector<2x1x256xi32> to vector<2x1x256xf32>
    %c0_6 = arith.constant 0 : index
    %18 = memref.load %arg1[%c0_6] : memref<1xf32, #tpu.memory_space<smem>>
    %cst_7 = arith.constant 1.000000e+00 : f32
    %19 = arith.subf %cst_7, %18 : f32
    %20 = vector.broadcast %19 : f32 to vector<2x1x256xf32>
    %21 = arith.mulf %20, %9 : vector<2x1x256xf32>
    %22 = vector.broadcast %18 : f32 to vector<2x1x256xf32>
    %23 = arith.mulf %22, %17 : vector<2x1x256xf32>
    %24 = arith.addf %21, %23 : vector<2x1x256xf32>
    %25 = vector.broadcast %24 : vector<2x1x256xf32> to vector<2x4x256xf32>
    %26 = arith.mulf %0, %25 : vector<2x4x256xf32>
    %c0_8 = arith.constant 0 : index
    %c0_9 = arith.constant 0 : index
    %c0_10 = arith.constant 0 : index
    %27 = vector.load %arg3[%c0_8, %c0_9, %c0_10] : memref<2x4x256xf32, #tpu.memory_space<vmem>>, vector<2x4x256xf32>
    tpu.vector_store %arg3[%c0_8, %c0_9, %c0_10], %26 {strides = array<i32>} : memref<2x4x256xf32, #tpu.memory_space<vmem>>, vector<2x4x256xf32>,
    return
  }
  func.func @transform_0(%arg0: i32, %arg1: memref<1xf32, #tpu.memory_space<smem>>) -> (i32, i32, i32) {
    %c0_i32 = arith.constant 0 : i32
    %c0_i32_0 = arith.constant 0 : i32
    %c0_i32_1 = arith.constant 0 : i32
    return %arg0, %c0_i32, %c0_i32_0 : i32, i32, i32
  }
  func.func @transform_1(%arg0: i32, %arg1: memref<1xf32, #tpu.memory_space<smem>>) -> (i32, i32, i32) {
    %c0_i32 = arith.constant 0 : i32
    %c0_i32_0 = arith.constant 0 : i32
    %c0_i32_1 = arith.constant 0 : i32
    return %arg0, %c0_i32, %c0_i32_0 : i32, i32, i32
  }
}

</mosaic_0001>

<llo_original>
// kernel: tpu_custom_call.1
$region0: #{tpu_custom_call.1}
  #allocation0 [shape = 'u32[]', space=smem, size = 0x4, offset = 0x4, fixed_abs, tag = 'smem constant byte address 0x4 - core index']
  #allocation1 [shape = 'u32[72,128]{1,0:T(1,128)}', space=vmem, size = 0x9000, scoped, tag = 'internal scratch']
  #allocation2 [shape = 's32[1]{0}', space=sflag, size = 0x4, scoped, tag = 'scoped memory for tpu_custom_call.1']
  #allocation3 [shape = 'f32[1]{0:T(128)S(6)}', space=smem, size = 0x200, scoped, tag = 'prefetched SMEM operand 0']
  %s0 = inlined_call_operand.<no memory space> [shape: f32[1], index: 0, kind: input, shape index: {}]
  %s1 = inlined_call_operand.hbm [shape: f32[2,4,256], index: 1, kind: input, shape index: {}]
  %s2 = inlined_call_operand.hbm [shape: f32[2,4,256], index: 2, kind: output, shape index: {}]
  %s3 = sld [smem:[#allocation0]]
  $region18: #{tpu_custom_call.1} parent=0
    _
  %s5 = ssub.s32 1, %s3
  %s6 = scalar_select 0, %s5, %s3
  %7 = sst [smem:[#allocation3]] %s0
  $region1: #{tpu_custom_call.1} parent=0
    #allocation4 [shape = 'u8[8192]{0}', space=vmem, size = 0x2000, scoped, tag = 'input window, operand 1, single buffered']
    #allocation5 [shape = 's32[1]{0}', space=sflag, size = 0x4, scoped, tag = 'scoped memory for tpu_custom_call.1']
    #allocation6 [shape = 's32[1]{0}', space=sflag, size = 0x4, scoped, tag = 'scoped memory for tpu_custom_call.1']
    #allocation7 [shape = 'u8[8192]{0}', space=vmem, size = 0x2000, scoped, tag = 'output window, operand 0, single buffered']
    %8 = vsyncpa [#allocation5], 0
    %9 = vsyncpa [#allocation6], 0
    // Predicated region
    $region2: #{tpu_custom_call.1} parent=1 // pred_check
      _
    $region3: #{tpu_custom_call.1} parent=1 // pred_check_branch
      %11 = sbr.rel (0) target = $region5
    $region4: #{tpu_custom_call.1} parent=1 // pred_region
      %13 = vsyncadd [#allocation5], 0
      %s14 = sshll.u32 %s1, 4
      %s15 = int_to_ptr.hbm [resolvable:$true] %s14
      %s16 = sshll.u32 [#allocation4], 4
      %s17 = int_to_ptr.vmem [resolvable:$true] %s16
      %22 = dma.hbm_to_vmem [thread:$0]  %s15, 256, %s17, [#allocation5], 128, 128, 8
    $region5: #{tpu_custom_call.1} parent=1 // pred_fallthru
      _
    // Predicated region
    $region6: #{tpu_custom_call.1} parent=1 // pred_check
      _
    $region7: #{tpu_custom_call.1} parent=1 // pred_check_branch
      %24 = sbr.rel (0) target = $region9
    $region8: #{tpu_custom_call.1} parent=1 // pred_region
      %26 = dma.done [#allocation5], 256
    $region9: #{tpu_custom_call.1} parent=1 // pred_fallthru
      _
    %v27 = vld [vmem:[#allocation4] sm:$0xff]
    %v28 = vld [vmem:[#allocation4 + $0x8] sm:$0xff]
    %31 = vst [vmem:[#allocation1] ss:$2 sm:$0xff] %v27
    %v32 = vld.sshfl [vmem:[#allocation1] sm:$0xff pattern:$0x75316420]
    %v33 = vld.sshfl [vmem:[#allocation1 + $0x8] sm:$0xff pattern:$0x75316420]
    %s34 = scalar_lea.vmem [#allocation1], 16
    %35 = vst [vmem:[%s34] ss:$2 sm:$0xff] %v28
    %v36 = vld.sshfl [vmem:[#allocation1 + $0x10] sm:$0xff pattern:$0x75316420]
    %v37 = vld.sshfl [vmem:[#allocation1 + $0x18] sm:$0xff pattern:$0x75316420]
    %vm42 = vcmask 1043456
    %v43 = vsel %vm42, %v32, 0.0
    %v44 = vrot.slane %v43, 4
    %v45 = vadd.f32 %v43, %v44
    %v46 = vrot.slane %v45, 2
    %v47 = vadd.f32 %v45, %v46
    %v48 = vrot.slane %v47, 1
    %v49 = vadd.f32 %v47, %v48
    %v50 = vsel %vm42, %v33, 0.0
    %v51 = vrot.slane %v50, 4
    %v52 = vadd.f32 %v50, %v51
    %v53 = vrot.slane %v52, 2
    %v54 = vadd.f32 %v52, %v53
    %v55 = vrot.slane %v54, 1
    %v56 = vadd.f32 %v54, %v55
    %v57 = vsel %vm42, %v36, 0.0
    %v58 = vrot.slane %v57, 4
    %v59 = vadd.f32 %v57, %v58
    %v60 = vrot.slane %v59, 2
    %v61 = vadd.f32 %v59, %v60
    %v62 = vrot.slane %v61, 1
    %v63 = vadd.f32 %v61, %v62
    %v64 = vsel %vm42, %v37, 0.0
    %v65 = vrot.slane %v64, 4
    %v66 = vadd.f32 %v64, %v65
    %v67 = vrot.slane %v66, 2
    %v68 = vadd.f32 %v66, %v67
    %v69 = vrot.slane %v68, 1
    %v70 = vadd.f32 %v68, %v69
    %v71 = vmul.f32 %v49, 0.25
    %v72 = vmul.f32 %v56, 0.25
    %v73 = vmul.f32 %v63, 0.25
    %v74 = vmul.f32 %v70, 0.25
    %v75 = vxor.u32 %v71, 2147483648
    %v76 = vxor.u32 %v72, 2147483648
    %v77 = vxor.u32 %v73, 2147483648
    %v78 = vxor.u32 %v74, 2147483648
    %v79 = vmul.f32 %v75, 1.442695
    %v80 = vpow.pop %v79
    %v81 = vmul.f32 %v76, 1.442695
    %v82 = vpow.pop %v81
    %v83 = vmul.f32 %v77, 1.442695
    %v84 = vpow.pop %v83
    %v85 = vmul.f32 %v78, 1.442695
    %v86 = vpow.pop %v85
    %v87 = vadd.f32 %v80, 1.0
    %v88 = vadd.f32 %v82, 1.0
    %v89 = vadd.f32 %v84, 1.0
    %v90 = vadd.f32 %v86, 1.0
    %v91 = vrcp.pop %v87
    %v92 = vmul.f32 %v87, %v91
    %v93 = vsub.f32 1.0, %v92
    %v94 = vmul.f32 %v91, %v93
    %v95 = vadd.f32 %v91, %v94
    %vm96 = vweird.f32 %v87
    %vm97 = vweird.f32 %v91
    %vm98 = vmor %vm96, %vm97
    %v99 = vsel %vm98, %v91, %v95
    %v100 = vand.u32 2147483647, %v87
    %vm101 = vcmp.eq.f32.partialorder %v100, 8.507059e+37
    %v102 = vand.u32 %v87, 2147483648
    %v103 = vor.u32 1.1754944e-38, %v102
    %v104 = vsel %vm101, %v103, %v99
    %v105 = vmul.f32 1.0, %v104
    %v106 = vrcp.pop %v88
    %v107 = vmul.f32 %v88, %v106
    %v108 = vsub.f32 1.0, %v107
    %v109 = vmul.f32 %v106, %v108
    %v110 = vadd.f32 %v106, %v109
    %vm111 = vweird.f32 %v88
    %vm112 = vweird.f32 %v106
    %vm113 = vmor %vm111, %vm112
    %v114 = vsel %vm113, %v106, %v110
    %v115 = vand.u32 2147483647, %v88
    %vm116 = vcmp.eq.f32.partialorder %v115, 8.507059e+37
    %v117 = vand.u32 %v88, 2147483648
    %v118 = vor.u32 1.1754944e-38, %v117
    %v119 = vsel %vm116, %v118, %v114
    %v120 = vmul.f32 1.0, %v119
    %v121 = vrcp.pop %v89
    %v122 = vmul.f32 %v89, %v121
    %v123 = vsub.f32 1.0, %v122
    %v124 = vmul.f32 %v121, %v123
    %v125 = vadd.f32 %v121, %v124
    %vm126 = vweird.f32 %v89
    %vm127 = vweird.f32 %v121
    %vm128 = vmor %vm126, %vm127
    %v129 = vsel %vm128, %v121, %v125
    %v130 = vand.u32 2147483647, %v89
    %vm131 = vcmp.eq.f32.partialorder %v130, 8.507059e+37
    %v132 = vand.u32 %v89, 2147483648
    %v133 = vor.u32 1.1754944e-38, %v132
    %v134 = vsel %vm131, %v133, %v129
    %v135 = vmul.f32 1.0, %v134
    %v136 = vrcp.pop %v90
    %v137 = vmul.f32 %v90, %v136
    %v138 = vsub.f32 1.0, %v137
    %v139 = vmul.f32 %v136, %v138
    %v140 = vadd.f32 %v136, %v139
    %vm141 = vweird.f32 %v90
    %vm142 = vweird.f32 %v136
    %vm143 = vmor %vm141, %vm142
    %v144 = vsel %vm143, %v136, %v140
    %v145 = vand.u32 2147483647, %v90
    %vm146 = vcmp.eq.f32.partialorder %v145, 8.507059e+37
    %v147 = vand.u32 %v90, 2147483648
    %v148 = vor.u32 1.1754944e-38, %v147
    %v149 = vsel %vm146, %v148, %v144
    %v150 = vmul.f32 1.0, %v149
    %v151 = vmax.f32 %v71, %v72
    %152 = vmax.xlane.f32.xlu0 %v151
    %v153 = vpop.xlane.xlu0 %152
    %v154 = vmax.f32 %v73, %v74
    %155 = vmax.xlane.f32.xlu0 %v154
    %v156 = vpop.xlane.xlu0 %155
    %v157 = vmul.f32 %v153, 0.8
    %v158 = vmul.f32 %v156, 0.8
    %vm159 = vcmp.lt.f32.partialorder %v71, %v157
    %vm160 = vcmp.lt.f32.partialorder %v72, %v157
    %vm161 = vcmp.lt.f32.partialorder %v73, %v158
    %vm162 = vcmp.lt.f32.partialorder %v74, %v158
    %v163 = vsel %vm159, 1, 0
    %v164 = vsel %vm160, 1, 0
    %v165 = vsel %vm161, 1, 0
    %v166 = vsel %vm162, 1, 0
    %v167 = vcvt.s32.f32 %v163
    %v168 = vcvt.s32.f32 %v164
    %v169 = vcvt.s32.f32 %v165
    %v170 = vcvt.s32.f32 %v166
    %s171 = sld [smem:[#allocation3]]
    %s172 = ssub.f32 1.0, %s171
    %v173 = vstv %s172
    %v174 = vmul.f32 %v173, %v105
    %v175 = vmul.f32 %v173, %v120
    %v176 = vmul.f32 %v173, %v135
    %v177 = vmul.f32 %v173, %v150
    %v178 = vstv %s171
    %v179 = vmul.f32 %v178, %v167
    %v180 = vmul.f32 %v178, %v168
    %v181 = vmul.f32 %v178, %v169
    %v182 = vmul.f32 %v178, %v170
    %v183 = vadd.f32 %v174, %v179
    %v184 = vadd.f32 %v175, %v180
    %v185 = vadd.f32 %v176, %v181
    %v186 = vadd.f32 %v177, %v182
    %v191 = vrot.slane %v184, 4
    %v192 = vrot.slane %v186, 4
    %v193 = vsel %vm42, %v183, %v191
    %v194 = vsel %vm42, %v185, %v192
    %v197 = vmul.f32 %v27, %v193
    %v198 = vmul.f32 %v28, %v194
    %199 = vst [vmem:[#allocation7] sm:$0xff] %v197
    %200 = vst [vmem:[#allocation7 + $0x8] sm:$0xff] %v198
    // Predicated region
    $region10: #{tpu_custom_call.1} parent=1 // pred_check
      _
    $region11: #{tpu_custom_call.1} parent=1 // pred_check_branch
      %202 = sbr.rel (0) target = $region13
    $region12: #{tpu_custom_call.1} parent=1 // pred_region
      %204 = vsyncadd [#allocation6], 0
      %s205 = sshll.u32 [#allocation7], 4
      %s206 = int_to_ptr.vmem [resolvable:$true] %s205
      %s207 = sshll.u32 %s2, 4
      %s208 = int_to_ptr.hbm [resolvable:$true] %s207
      %213 = dma.vmem_to_hbm [thread:$0]  %s206, 256, %s208, [#allocation6], 128, 128, 8
    $region13: #{tpu_custom_call.1} parent=1 // pred_fallthru
      _
    // Predicated region
    $region14: #{tpu_custom_call.1} parent=1 // pred_check
      _
    $region15: #{tpu_custom_call.1} parent=1 // pred_check_branch
      %215 = sbr.rel (0) target = $region17
    $region16: #{tpu_custom_call.1} parent=1 // pred_region
      %217 = dma.done [#allocation6], 256
    $region17: #{tpu_custom_call.1} parent=1 // pred_fallthru
      _
    %218 = vsyncpa [#allocation5], 1
    %219 = vsyncpa [#allocation6], 1

</llo_original>
